<compile_context>
chip_gen: v7x
topology: tpu7x:2x2x1
jax: 0.10.0
libtpu: 0.0.40
codegen_flags: <defaults>
</compile_context>

<pallas_src>
import jax
import jax.numpy as jnp
from jax.experimental import pallas as pl
from jax.experimental.pallas import tpu as pltpu

EMB_DIM = 32
HID_DIM = 64
BATCH = 2
SEQ_LEN = 8


def _round_up(x, m):
    return (x + m - 1) // m * m


def ffn_kernel(x_ref, w1_ref, b1_ref, w2_ref, b2_ref, o_ref):
    # x_ref:  (TM, E)      f32     w1_ref: (E, F_pad)     bf16   b1_ref: (1, F_pad) f32
    # w2_ref: (F_pad, E_pad) bf16  b2_ref: (1, E_pad)     f32    o_ref:  (TM, E_pad) f32
    x = x_ref[...]
    # Linear 1: bf16 operands, f32 accumulation on the MXU; bias + ReLU on the VPU in f32.
    h = jnp.dot(x.astype(jnp.bfloat16), w1_ref[...],
                preferred_element_type=jnp.float32)
    h = jnp.maximum(h + b1_ref[...], 0.0)
    # TODO(synk): F.dropout(p=0.1) is identity here (training=False); a training-mode
    # kernel would draw a mask via pltpu.prng_seed / pltpu.stateful_bernoulli.
    # Linear 2: bf16 operands, f32 accumulation; bias add + lane-dense store in f32.
    y = jnp.dot(h.astype(jnp.bfloat16), w2_ref[...],
                preferred_element_type=jnp.float32)
    o_ref[...] = y + b2_ref[...]


def prepare_ffn_params(w1, b1, w2, b2):
    """One-time weight prep (padding + bf16 cast), hoisted out of the call path.

    w1: (E, F), b1: (F,), w2: (F, E), b2: (E,)  -- (in_dim, out_dim) layout so
    y = x @ W + b matches PyTorch nn.Linear (y = x @ weight.T + bias).
    """
    E, F = w1.shape
    F_pad = _round_up(F, 128)
    E_pad = _round_up(E, 128)
    # Zero padding: padded hidden cols produce h = relu(0 + 0) = 0 and W2's padded
    # rows are 0, so padded dims contribute nothing to the valid output columns.
    w1p = jnp.pad(w1.astype(jnp.float32), ((0, 0), (0, F_pad - F))).astype(jnp.bfloat16)
    b1p = jnp.pad(b1.astype(jnp.float32), (0, F_pad - F)).reshape(1, F_pad)
    w2p = jnp.pad(w2.astype(jnp.float32),
                  ((0, F_pad - F), (0, E_pad - E))).astype(jnp.bfloat16)
    b2p = jnp.pad(b2.astype(jnp.float32), (0, E_pad - E)).reshape(1, E_pad)
    return w1p, b1p, w2p, b2p


def position_wise_ffn(x, w1p, b1p, w2p, b2p, *, block_rows=256):
    """y = relu(x @ W1 + b1) @ W2 + b2, with pre-padded bf16 weights.

    x: (B, T, E) f32.  Weights come from prepare_ffn_params (called once).
    """
    B, T, E = x.shape
    F_pad = w1p.shape[1]
    E_pad = w2p.shape[1]
    N = B * T

    # Row tile: one grid step for small N (tm == N_pad), 256-row tiles otherwise.
    tm = min(_round_up(block_rows, 8), _round_up(N, 8))
    N_pad = _round_up(N, tm)
    grid = (N_pad // tm,)

    # Only pad rows of x (zero pad widths at the demo shape -> no-op under jit).
    # E (=32) is left unpadded: block last dim == full array dim, which is legal,
    # and it cuts the dominant x DMA traffic ~4x vs padding to 128.
    x2 = jnp.pad(x.reshape(N, E).astype(jnp.float32), ((0, N_pad - N), (0, 0)))

    # grid=(1,) at small sizes: no cross-core split (megacore only pays off with
    # MXU-saturating tiles); mark the row axis "parallel" only when it exists.
    dims = ("arbitrary",) if grid[0] == 1 else ("parallel",)

    out = pl.pallas_call(
        ffn_kernel,
        out_shape=jax.ShapeDtypeStruct((N_pad, E_pad), jnp.float32),
        grid=grid,
        in_specs=[
            pl.BlockSpec((tm, E), lambda i: (i, 0)),          # x row tile (unpadded E)
            pl.BlockSpec((E, F_pad), lambda i: (0, 0)),       # W1 (resident)
            pl.BlockSpec((1, F_pad), lambda i: (0, 0)),       # b1 (resident)
            pl.BlockSpec((F_pad, E_pad), lambda i: (0, 0)),   # W2 (resident)
            pl.BlockSpec((1, E_pad), lambda i: (0, 0)),       # b2 (resident)
        ],
        out_specs=pl.BlockSpec((tm, E_pad), lambda i: (i, 0)),  # lane-dense (128) store
        compiler_params=pltpu.CompilerParams(dimension_semantics=dims),
    )(x2, w1p, b1p, w2p, b2p)

    return out[:N, :E].reshape(B, T, E)


def ffn_reference(x, w1, b1, w2, b2):
    h = jnp.maximum(jnp.einsum('bte,ef->btf', x, w1) + b1, 0.0)
    return jnp.einsum('btf,fe->bte', h, w2) + b2


if __name__ == "__main__":
    key = jax.random.PRNGKey(0)
    kx, k1, kb1, k2, kb2 = jax.random.split(key, 5)

    # PyTorch nn.Linear-style init; weights stored as (in_dim, out_dim).
    bound1 = 1.0 / (EMB_DIM ** 0.5)
    bound2 = 1.0 / (HID_DIM ** 0.5)
    w1 = jax.random.uniform(k1, (EMB_DIM, HID_DIM), jnp.float32, -bound1, bound1)
    b1 = jax.random.uniform(kb1, (HID_DIM,), jnp.float32, -bound1, bound1)
    w2 = jax.random.uniform(k2, (HID_DIM, EMB_DIM), jnp.float32, -bound2, bound2)
    b2 = jax.random.uniform(kb2, (EMB_DIM,), jnp.float32, -bound2, bound2)

    x = jax.random.normal(kx, (BATCH, SEQ_LEN, EMB_DIM), jnp.float32)

    # One-time weight prep (padding + bf16 cast), done once "at init".
    w1p, b1p, w2p, b2p = prepare_ffn_params(w1, b1, w2, b2)
    w1p, b1p, w2p, b2p = jax.block_until_ready((w1p, b1p, w2p, b2p))

    # Default block_rows -> tm == N_pad == 16, grid=(1,): the whole FFN is one step.
    ffn = jax.jit(position_wise_ffn, static_argnames=("block_rows",))
    out = ffn(x, w1p, b1p, w2p, b2p)
    out = jax.block_until_ready(out)

    ref = ffn_reference(x, w1, b1, w2, b2)

    assert out.shape == (BATCH, SEQ_LEN, EMB_DIM)
    assert bool(jnp.all(jnp.isfinite(out)))
    # bf16 MXU operands with f32 accumulation -> small numeric delta vs f32 reference.
    assert bool(jnp.allclose(out, ref, rtol=2e-2, atol=1e-2)), \
        float(jnp.max(jnp.abs(out - ref)))
    print("KERNEL_OK")
</pallas_src>

<mosaic_0001>
module attributes {stable_mosaic.version = 11 : i64} {
  func.func @ffn_kernel(%arg0: i32, %arg1: memref<16x32xf32, #tpu.memory_space<vmem>>, %arg2: memref<32x128xbf16, #tpu.memory_space<vmem>>, %arg3: memref<1x128xf32, #tpu.memory_space<vmem>>, %arg4: memref<128x128xbf16, #tpu.memory_space<vmem>>, %arg5: memref<1x128xf32, #tpu.memory_space<vmem>>, %arg6: memref<16x128xf32, #tpu.memory_space<vmem>>) attributes {dimension_semantics = [#tpu.dimension_semantics<arbitrary>], iteration_bounds = array<i64: 1>, scalar_prefetch = 0 : i64, scratch_operands = 0 : i64, tpu.core_type = #tpu.core_type<tc>, window_params = [{transform_indices = @transform_0, window_bounds = array<i64: 16, 32>}, {pipeline_mode = #tpu.pipeline_mode<synchronous>, transform_indices = @transform_1, window_bounds = array<i64: 32, 128>}, {pipeline_mode = #tpu.pipeline_mode<synchronous>, transform_indices = @transform_2, window_bounds = array<i64: 1, 128>}, {pipeline_mode = #tpu.pipeline_mode<synchronous>, transform_indices = @transform_3, window_bounds = array<i64: 128, 128>}, {pipeline_mode = #tpu.pipeline_mode<synchronous>, transform_indices = @transform_4, window_bounds = array<i64: 1, 128>}, {transform_indices = @transform_5, window_bounds = array<i64: 16, 128>}]} {
    %c0 = arith.constant 0 : index
    %c0_0 = arith.constant 0 : index
    %0 = vector.load %arg1[%c0, %c0_0] : memref<16x32xf32, #tpu.memory_space<vmem>>, vector<16x32xf32>
    %1 = arith.truncf %0 : vector<16x32xf32> to vector<16x32xbf16>
    %c0_1 = arith.constant 0 : index
    %c0_2 = arith.constant 0 : index
    %2 = vector.load %arg2[%c0_1, %c0_2] : memref<32x128xbf16, #tpu.memory_space<vmem>>, vector<32x128xbf16>
    %cst = arith.constant dense<0.000000e+00> : vector<16x128xf32>
    %3 = tpu.matmul %1, %2, %cst {dimension_numbers = #tpu.dot_dimension_numbers<[1], [0], [0], [1], [0, 0, 1, 1], [], []>} : vector<16x32xbf16>, vector<32x128xbf16>, vector<16x128xf32> -> vector<16x128xf32>
    %c0_3 = arith.constant 0 : index
    %c0_4 = arith.constant 0 : index
    %4 = vector.load %arg3[%c0_3, %c0_4] : memref<1x128xf32, #tpu.memory_space<vmem>>, vector<1x128xf32>
    %5 = vector.broadcast %4 : vector<1x128xf32> to vector<16x128xf32>
    %6 = arith.addf %3, %5 : vector<16x128xf32>
    %cst_5 = arith.constant 0.000000e+00 : f32
    %7 = vector.broadcast %cst_5 : f32 to vector<16x128xf32>
    %8 = arith.maximumf %6, %7 : vector<16x128xf32>
    %9 = arith.truncf %8 : vector<16x128xf32> to vector<16x128xbf16>
    %c0_6 = arith.constant 0 : index
    %c0_7 = arith.constant 0 : index
    %10 = vector.load %arg4[%c0_6, %c0_7] : memref<128x128xbf16, #tpu.memory_space<vmem>>, vector<128x128xbf16>
    %cst_8 = arith.constant dense<0.000000e+00> : vector<16x128xf32>
    %11 = tpu.matmul %9, %10, %cst_8 {dimension_numbers = #tpu.dot_dimension_numbers<[1], [0], [0], [1], [0, 0, 1, 1], [], []>} : vector<16x128xbf16>, vector<128x128xbf16>, vector<16x128xf32> -> vector<16x128xf32>
    %c0_9 = arith.constant 0 : index
    %c0_10 = arith.constant 0 : index
    %12 = vector.load %arg5[%c0_9, %c0_10] : memref<1x128xf32, #tpu.memory_space<vmem>>, vector<1x128xf32>
    %13 = vector.broadcast %12 : vector<1x128xf32> to vector<16x128xf32>
    %14 = arith.addf %11, %13 : vector<16x128xf32>
    %c0_11 = arith.constant 0 : index
    %c0_12 = arith.constant 0 : index
    %15 = vector.load %arg6[%c0_11, %c0_12] : memref<16x128xf32, #tpu.memory_space<vmem>>, vector<16x128xf32>
    tpu.vector_store %arg6[%c0_11, %c0_12], %14 {strides = array<i32>} : memref<16x128xf32, #tpu.memory_space<vmem>>, vector<16x128xf32>,
    return
  }
  func.func @transform_0(%arg0: i32) -> (i32, i32) {
    %c0_i32 = arith.constant 0 : i32
    %c0_i32_0 = arith.constant 0 : i32
    return %arg0, %c0_i32 : i32, i32
  }
  func.func @transform_1(%arg0: i32) -> (i32, i32) {
    %c0_i32 = arith.constant 0 : i32
    %c0_i32_0 = arith.constant 0 : i32
    %c0_i32_1 = arith.constant 0 : i32
    return %c0_i32, %c0_i32_0 : i32, i32
  }
  func.func @transform_2(%arg0: i32) -> (i32, i32) {
    %c0_i32 = arith.constant 0 : i32
    %c0_i32_0 = arith.constant 0 : i32
    %c0_i32_1 = arith.constant 0 : i32
    return %c0_i32, %c0_i32_0 : i32, i32
  }
  func.func @transform_3(%arg0: i32) -> (i32, i32) {
    %c0_i32 = arith.constant 0 : i32
    %c0_i32_0 = arith.constant 0 : i32
    %c0_i32_1 = arith.constant 0 : i32
    return %c0_i32, %c0_i32_0 : i32, i32
  }
  func.func @transform_4(%arg0: i32) -> (i32, i32) {
    %c0_i32 = arith.constant 0 : i32
    %c0_i32_0 = arith.constant 0 : i32
    %c0_i32_1 = arith.constant 0 : i32
    return %c0_i32, %c0_i32_0 : i32, i32
  }
  func.func @transform_5(%arg0: i32) -> (i32, i32) {
    %c0_i32 = arith.constant 0 : i32
    %c0_i32_0 = arith.constant 0 : i32
    return %arg0, %c0_i32 : i32, i32
  }
}

</mosaic_0001>

<llo_original>
// kernel: position_wise_ffn.1
$region0: #{position_wise_ffn.1}
  #allocation0 [shape = 'u32[]', space=smem, size = 0x4, offset = 0x4, fixed_abs, tag = 'smem constant byte address 0x4 - core index']
  #allocation1 [shape = 'u32[144,128]{1,0:T(1,128)}', space=vmem, size = 0x12000, scoped, tag = 'internal scratch']
  %s0 = inlined_call_operand.hbm [shape: f32[16,32], index: 0, kind: input, shape index: {}]
  %s1 = inlined_call_operand.hbm [shape: bf16[32,128], index: 1, kind: input, shape index: {}]
  %s2 = inlined_call_operand.vmem [shape: f32[1,128], index: 2, kind: input, shape index: {}]
  %s3 = inlined_call_operand.hbm [shape: bf16[128,128], index: 3, kind: input, shape index: {}]
  %s4 = inlined_call_operand.vmem [shape: f32[1,128], index: 4, kind: input, shape index: {}]
  %s5 = inlined_call_operand.vmem [shape: f32[16,128], index: 5, kind: output, shape index: {}]
  %s6 = sld [smem:[#allocation0]]
  $region42: #{position_wise_ffn.1} parent=0
    _
  %s8 = ssub.s32 1, %s6
  %s9 = scalar_select 0, %s8, %s6
  $region1: #{position_wise_ffn.1} parent=0
    #allocation2 [shape = 'u8[8192]{0}', space=vmem, size = 0x2000, scoped, tag = 'input window, operand 0, single buffered']
    #allocation3 [shape = 's32[1]{0}', space=sflag, size = 0x4, scoped, tag = 'scoped memory for position_wise_ffn.1']
    #allocation4 [shape = 'u8[8192]{0}', space=vmem, size = 0x2000, scoped, tag = 'input window, operand 1, single buffered']
    #allocation5 [shape = 's32[1]{0}', space=sflag, size = 0x4, scoped, tag = 'scoped memory for position_wise_ffn.1']
    #allocation6 [shape = 'u8[32768]{0}', space=vmem, size = 0x8000, scoped, tag = 'input window, operand 3, single buffered']
    %10 = vsyncpa [#allocation3], 0
    %11 = vsyncpa [#allocation5], 0
    // Predicated region
    $region2: #{position_wise_ffn.1} parent=1 // pred_check
      _
    $region3: #{position_wise_ffn.1} parent=1 // pred_check_branch
      %13 = sbr.rel (0) target = $region5
    $region4: #{position_wise_ffn.1} parent=1 // pred_region
      %s15 = ssub.s32 256, 256
      %16 = vsyncadd [#allocation3], %s15
      %s17 = sshll.u32 [#allocation2], 4
      %s18 = int_to_ptr.vmem [resolvable:$true] %s17
      %23 = dma.hbm_to_vmem [thread:$0]  %s0, 256, %s18, [#allocation3], 128, 128, 8
    $region5: #{position_wise_ffn.1} parent=1 // pred_fallthru
      _
    // Predicated region
    $region6: #{position_wise_ffn.1} parent=1 // pred_check
      _
    $region7: #{position_wise_ffn.1} parent=1 // pred_check_branch
      %25 = sbr.rel (0) target = $region9
    $region8: #{position_wise_ffn.1} parent=1 // pred_region
      %s27 = ssub.s32 256, 256
      %28 = vsyncadd [#allocation5], %s27
      %s29 = sshll.u32 [#allocation4], 4
      %s30 = int_to_ptr.vmem [resolvable:$true] %s29
      %35 = dma.hbm_to_vmem [thread:$0]  %s1, 256, %s30, [#allocation5], 64, 64, 4
    $region9: #{position_wise_ffn.1} parent=1 // pred_fallthru
      _
    // Predicated region
    $region10: #{position_wise_ffn.1} parent=1 // pred_check
      _
    $region11: #{position_wise_ffn.1} parent=1 // pred_check_branch
      %37 = sbr.rel (0) target = $region13
    $region12: #{position_wise_ffn.1} parent=1 // pred_region
      _
    $region13: #{position_wise_ffn.1} parent=1 // pred_fallthru
      _
    // Predicated region
    $region14: #{position_wise_ffn.1} parent=1 // pred_check
      _
    $region15: #{position_wise_ffn.1} parent=1 // pred_check_branch
      %39 = sbr.rel (0) target = $region17
    $region16: #{position_wise_ffn.1} parent=1 // pred_region
      %s41 = ssub.s32 1024, 1024
      %42 = vsyncadd [#allocation5], %s41
      %s43 = sshll.u32 [#allocation6], 4
      %s44 = int_to_ptr.vmem [resolvable:$true] %s43
      %49 = dma.hbm_to_vmem [thread:$0]  %s3, 1024, %s44, [#allocation5], 64, 64, 4
    $region17: #{position_wise_ffn.1} parent=1 // pred_fallthru
      _
    // Predicated region
    $region18: #{position_wise_ffn.1} parent=1 // pred_check
      _
    $region19: #{position_wise_ffn.1} parent=1 // pred_check_branch
      %51 = sbr.rel (0) target = $region21
    $region20: #{position_wise_ffn.1} parent=1 // pred_region
      _
    $region21: #{position_wise_ffn.1} parent=1 // pred_fallthru
      _
    // Predicated region
    $region22: #{position_wise_ffn.1} parent=1 // pred_check
      _
    $region23: #{position_wise_ffn.1} parent=1 // pred_check_branch
      %53 = sbr.rel (0) target = $region25
    $region24: #{position_wise_ffn.1} parent=1 // pred_region
      %54 = dma.done [#allocation3], 256
    $region25: #{position_wise_ffn.1} parent=1 // pred_fallthru
      _
    // Predicated region
    $region26: #{position_wise_ffn.1} parent=1 // pred_check
      _
    $region27: #{position_wise_ffn.1} parent=1 // pred_check_branch
      %56 = sbr.rel (0) target = $region29
    $region28: #{position_wise_ffn.1} parent=1 // pred_region
      %57 = dma.done [#allocation5], 256
    $region29: #{position_wise_ffn.1} parent=1 // pred_fallthru
      _
    // Predicated region
    $region30: #{position_wise_ffn.1} parent=1 // pred_check
      _
    $region31: #{position_wise_ffn.1} parent=1 // pred_check_branch
      %59 = sbr.rel (0) target = $region33
    $region32: #{position_wise_ffn.1} parent=1 // pred_region
      %60 = dma.done [#allocation5], 1024
    $region33: #{position_wise_ffn.1} parent=1 // pred_fallthru
      _
    %v62 = vld [vmem:[#allocation2] sm:$0xff]
    %v63 = vld [vmem:[#allocation2 + $0x8] sm:$0xff]
    %v64 = vpack.c.bf16 %v63, %v62
    %v65 = vld [vmem:[#allocation4] sm:$0xf]
    %v66 = vld [vmem:[#allocation4 + $0x4] sm:$0xf]
    %v67 = vld [vmem:[#allocation4 + $0x8] sm:$0xf]
    %v68 = vld [vmem:[#allocation4 + $0xc] sm:$0xf]
    %v69 = vld [vmem:[%s2] sm:$0x1]
    %v71 = vlaneseq
    %v72 = vshrl.u32 %v71, 7
    %v73 = vsub.s32 0, %v72
    %v74 = vrot.slane %v69, %v73
    %v80 = vunpack.c.l.b16 %v65
    %v81 = vunpack.c.l.b16 %v66
    %v82 = vunpack.c.l.b16 %v67
    %v83 = vunpack.c.l.b16 %v68
    %v84 = vpack.c.b16 %v81, %v80
    %v85 = vpack.c.b16 %v83, %v82
    %vm88 = vcmask 261120
    %v90 = vsel %vm88, %v64, 0
    %92 = vmatprep.subr.bf16.mxu0 0
    %93 = vmatpush1.bf16.msra.mxu0 %v84
    %94 = vmatprep.subr.bf16.mxu0 0
    %95 = vmatpush1.bf16.msra.mxu0 %v85
    %96 = vmatprep.subr.bf16.mxu0 0
    %97 = vmatpush1.bf16.msra.mxu0 0
    %98 = vmatprep.subr.bf16.mxu0 0
    %99 = vmatpush1.bf16.msra.mxu0 0
    %100 = vmatprep.subr.bf16.mxu0 0
    %101 = vmatpush1.bf16.msra.mxu0 0
    %102 = vmatprep.subr.bf16.mxu0 0
    %103 = vmatpush1.bf16.msra.mxu0 0
    %104 = vmatprep.subr.bf16.mxu0 0
    %105 = vmatpush1.bf16.msra.mxu0 0
    %106 = vmatprep.subr.bf16.mxu0 0
    %107 = vmatpush1.bf16.msra.mxu0 0
    %108 = vmatprep.subr.bf16.mxu0 0
    %109 = vmatpush1.bf16.msra.mxu0 0
    %110 = vmatprep.subr.bf16.mxu0 0
    %111 = vmatpush1.bf16.msra.mxu0 0
    %112 = vmatprep.subr.bf16.mxu0 0
    %113 = vmatpush1.bf16.msra.mxu0 0
    %114 = vmatprep.subr.bf16.mxu0 0
    %115 = vmatpush1.bf16.msra.mxu0 0
    %116 = vmatprep.subr.bf16.mxu0 0
    %117 = vmatpush1.bf16.msra.mxu0 0
    %118 = vmatprep.subr.bf16.mxu0 0
    %119 = vmatpush1.bf16.msra.mxu0 0
    %120 = vmatprep.subr.bf16.mxu0 0
    %121 = vmatpush1.bf16.msra.mxu0 0
    %122 = vmatprep.subr.bf16.mxu0 0
    %123 = vmatpush1.bf16.msra.mxu0 0
    %124 = vmatprep.mubr.bf16.mxu0 0
    %125 = vmatmul.mubr.bf16.gmra.mrb[0].mxu0 %v90
    %v126 = vpop.f32.mrb[0].mxu0
    %v127 = vadd.f32 %v74, %v126
    %v128 = vpop.f32.mrb[0].mxu0
    %v129 = vpop.f32.mrb[0].mxu0
    %v130 = vadd.f32 %v74, %v129
    %v131 = vpop.f32.mrb[0].mxu0
    %132 = vdwg.mxu0
    %v133 = vmax.f32 %v127, 0.0
    %v134 = vmax.f32 %v130, 0.0
    %v135 = vpack.c.bf16 %v134, %v133
    %v136 = vld [vmem:[#allocation6] sm:$0xf]
    %v137 = vld [vmem:[#allocation6 + $0x4] sm:$0xf]
    %v138 = vld [vmem:[#allocation6 + $0x8] sm:$0xf]
    %v139 = vld [vmem:[#allocation6 + $0xc] sm:$0xf]
    %v140 = vld [vmem:[#allocation6 + $0x10] sm:$0xf]
    %v141 = vld [vmem:[#allocation6 + $0x14] sm:$0xf]
    %v142 = vld [vmem:[#allocation6 + $0x18] sm:$0xf]
    %v143 = vld [vmem:[#allocation6 + $0x1c] sm:$0xf]
    %v144 = vld [vmem:[#allocation6 + $0x20] sm:$0xf]
    %v145 = vld [vmem:[#allocation6 + $0x24] sm:$0xf]
    %v146 = vld [vmem:[#allocation6 + $0x28] sm:$0xf]
    %v147 = vld [vmem:[#allocation6 + $0x2c] sm:$0xf]
    %v148 = vld [vmem:[#allocation6 + $0x30] sm:$0xf]
    %v149 = vld [vmem:[#allocation6 + $0x34] sm:$0xf]
    %v150 = vld [vmem:[#allocation6 + $0x38] sm:$0xf]
    %v151 = vld [vmem:[#allocation6 + $0x3c] sm:$0xf]
    %v152 = vld [vmem:[%s4] sm:$0x1]
    %v154 = vlaneseq
    %v155 = vshrl.u32 %v154, 7
    %v156 = vsub.s32 0, %v155
    %v157 = vrot.slane %v152, %v156
    %v175 = vunpack.c.l.b16 %v136
    %v176 = vunpack.c.l.b16 %v137
    %v177 = vunpack.c.l.b16 %v138
    %v178 = vunpack.c.l.b16 %v139
    %v179 = vunpack.c.l.b16 %v140
    %v180 = vunpack.c.l.b16 %v141
    %v181 = vunpack.c.l.b16 %v142
    %v182 = vunpack.c.l.b16 %v143
    %v183 = vunpack.c.l.b16 %v144
    %v184 = vunpack.c.l.b16 %v145
    %v185 = vunpack.c.l.b16 %v146
    %v186 = vunpack.c.l.b16 %v147
    %v187 = vunpack.c.l.b16 %v148
    %v188 = vunpack.c.l.b16 %v149
    %v189 = vunpack.c.l.b16 %v150
    %v190 = vunpack.c.l.b16 %v151
    %v191 = vpack.c.b16 %v176, %v175
    %v192 = vpack.c.b16 %v178, %v177
    %v193 = vpack.c.b16 %v180, %v179
    %v194 = vpack.c.b16 %v182, %v181
    %v195 = vpack.c.b16 %v184, %v183
    %v196 = vpack.c.b16 %v186, %v185
    %v197 = vpack.c.b16 %v188, %v187
    %v198 = vpack.c.b16 %v190, %v189
    %207 = vmatprep.subr.bf16.mxu0 0
    %208 = vmatpush1.bf16.msra.mxu0 %v191
    %209 = vmatprep.subr.bf16.mxu0 0
    %210 = vmatpush1.bf16.msra.mxu0 %v192
    %211 = vmatprep.subr.bf16.mxu0 0
    %212 = vmatpush1.bf16.msra.mxu0 %v193
    %213 = vmatprep.subr.bf16.mxu0 0
    %214 = vmatpush1.bf16.msra.mxu0 %v194
    %215 = vmatprep.subr.bf16.mxu0 0
    %216 = vmatpush1.bf16.msra.mxu0 %v195
    %217 = vmatprep.subr.bf16.mxu0 0
    %218 = vmatpush1.bf16.msra.mxu0 %v196
    %219 = vmatprep.subr.bf16.mxu0 0
    %220 = vmatpush1.bf16.msra.mxu0 %v197
    %221 = vmatprep.subr.bf16.mxu0 0
    %222 = vmatpush1.bf16.msra.mxu0 %v198
    %223 = vmatprep.subr.bf16.mxu0 0
    %224 = vmatpush1.bf16.msra.mxu0 0
    %225 = vmatprep.subr.bf16.mxu0 0
    %226 = vmatpush1.bf16.msra.mxu0 0
    %227 = vmatprep.subr.bf16.mxu0 0
    %228 = vmatpush1.bf16.msra.mxu0 0
    %229 = vmatprep.subr.bf16.mxu0 0
    %230 = vmatpush1.bf16.msra.mxu0 0
    %231 = vmatprep.subr.bf16.mxu0 0
    %232 = vmatpush1.bf16.msra.mxu0 0
    %233 = vmatprep.subr.bf16.mxu0 0
    %234 = vmatpush1.bf16.msra.mxu0 0
    %235 = vmatprep.subr.bf16.mxu0 0
    %236 = vmatpush1.bf16.msra.mxu0 0
    %237 = vmatprep.subr.bf16.mxu0 0
    %238 = vmatpush1.bf16.msra.mxu0 0
    %239 = vmatprep.mubr.bf16.mxu0 0
    %240 = vmatmul.mubr.bf16.gmra.mrb[0].mxu0 %v135
    %v241 = vpop.f32.mrb[0].mxu0
    %v242 = vadd.f32 %v157, %v241
    %v243 = vpop.f32.mrb[0].mxu0
    %v244 = vpop.f32.mrb[0].mxu0
    %v245 = vadd.f32 %v157, %v244
    %v246 = vpop.f32.mrb[0].mxu0
    %247 = vdwg.mxu0
    %248 = vst [vmem:[%s5] sm:$0xff] %v242
    %249 = vst [vmem:[%s5 + $0x8] sm:$0xff] %v245
    // Predicated region
    $region34: #{position_wise_ffn.1} parent=1 // pred_check
      _
    $region35: #{position_wise_ffn.1} parent=1 // pred_check_branch
      %251 = sbr.rel (0) target = $region37
    $region36: #{position_wise_ffn.1} parent=1 // pred_region
      _
    $region37: #{position_wise_ffn.1} parent=1 // pred_fallthru
      _
    // Predicated region
    $region38: #{position_wise_ffn.1} parent=1 // pred_check
      _
    $region39: #{position_wise_ffn.1} parent=1 // pred_check_branch
      %253 = sbr.rel (0) target = $region41
    $region40: #{position_wise_ffn.1} parent=1 // pred_region
      _
    $region41: #{position_wise_ffn.1} parent=1 // pred_fallthru
      _
    %254 = vsyncpa [#allocation3], 1
    %255 = vsyncpa [#allocation5], 1

</llo_original>
